<compile_context>
chip_gen: v7x
topology: tpu7x:2x2x1
jax: 0.10.0
libtpu: 0.0.40
codegen_flags: <defaults>
</compile_context>

<pallas_src>
import math

import jax
import jax.numpy as jnp
from jax.experimental import pallas as pl
from jax.experimental.pallas import tpu as pltpu

LANES = 128          # vreg lane width
MAX_BLOCK_ROWS = 512 # rows (sublane dim) per grid step; ~512*128*4B = 256 KiB/block


def dis_kernel(wb_ref, x_ref, o_ref):
    # wb_ref: SMEM (2,) f32  -> [w, b]   (folded affine)
    # x_ref : VMEM (block_rows, 128) f32
    w = wb_ref[0]
    b = wb_ref[1]
    o_ref[...] = jax.nn.sigmoid(x_ref[...] * w + b)


def dis_forward(x, params):
    """x: (batch, 1) float32 -> (batch, 1) float32 in (0, 1)."""
    w1, b1, w2, b2, w3, b3 = params
    batch = x.shape[0]

    # ---- Fold the three Linear layers into a single scalar affine (wrapper-side).
    w_eff = (w1 @ w2 @ w3).reshape(())                 # scalar
    b_eff = ((b1 @ w2 + b2) @ w3 + b3).reshape(())     # scalar
    wb = jnp.stack([w_eff, b_eff]).astype(jnp.float32)

    # ---- Lane-dense layout: flatten (batch,1) -> pad -> (padded_rows, 128).
    rows = -(-batch // LANES)                                   # ceil
    block_rows = min(MAX_BLOCK_ROWS, ((rows + 7) // 8) * 8)     # multiple of 8 sublanes
    padded_rows = -(-rows // block_rows) * block_rows
    padded = padded_rows * LANES

    x_flat = x.reshape(-1).astype(jnp.float32)
    x_pad = jnp.pad(x_flat, (0, padded - batch))
    x2d = x_pad.reshape(padded_rows, LANES)

    grid = (padded_rows // block_rows,)

    out2d = pl.pallas_call(
        dis_kernel,
        out_shape=jax.ShapeDtypeStruct((padded_rows, LANES), jnp.float32),
        grid=grid,
        in_specs=[
            pl.BlockSpec(memory_space=pltpu.MemorySpace.SMEM),   # folded [w, b]
            pl.BlockSpec((block_rows, LANES), lambda i: (i, 0)),  # x tile
        ],
        out_specs=pl.BlockSpec((block_rows, LANES), lambda i: (i, 0)),
        compiler_params=pltpu.CompilerParams(
            dimension_semantics=("parallel",)),
    )(wb, x2d)

    return out2d.reshape(-1)[:batch].reshape(batch, 1)


def init_params(key):
    """Deterministic init mimicking PyTorch nn.Linear default (U[-1/sqrt(in), 1/sqrt(in)]).
    Weights are stored TRANSPOSED as (in_features, out_features); biases as (1, out)."""
    dims = [(1, 10), (10, 10), (10, 1)]
    params = []
    for (fan_in, fan_out) in dims:
        key, kw, kb = jax.random.split(key, 3)
        bound = 1.0 / math.sqrt(fan_in)
        w_t = jax.random.uniform(kw, (fan_in, fan_out), jnp.float32, -bound, bound)
        b = jax.random.uniform(kb, (1, fan_out), jnp.float32, -bound, bound)
        params.extend([w_t, b])
    return tuple(params)


def reference_forward(x, params):
    """Pure-JAX reference matching the PyTorch module layer-by-layer."""
    w1, b1, w2, b2, w3, b3 = params
    h = x @ w1 + b1
    h = h @ w2 + b2
    h = h @ w3 + b3
    return jax.nn.sigmoid(h)


if __name__ == "__main__":
    key = jax.random.PRNGKey(0)
    key, kx1, kx2 = jax.random.split(key, 3)
    params = init_params(key)

    # Small test (matches the module's (batch, 1) interface).
    batch = 8
    x = jax.random.normal(kx1, (batch, 1), jnp.float32)
    out = jax.block_until_ready(dis_forward(x, params))
    ref = reference_forward(x, params)
    assert out.shape == (batch, 1), out.shape
    assert jnp.allclose(out, ref, atol=1e-5, rtol=1e-5), (out, ref)

    # A second shape that exercises padding of a non-128-divisible batch.
    batch2 = 1000
    x2 = jax.random.normal(kx2, (batch2, 1), jnp.float32)
    out2 = jax.block_until_ready(dis_forward(x2, params))
    ref2 = reference_forward(x2, params)
    assert out2.shape == (batch2, 1), out2.shape
    assert jnp.allclose(out2, ref2, atol=1e-5, rtol=1e-5)

    print("KERNEL_OK")
</pallas_src>

<mosaic_0001>
module attributes {stable_mosaic.version = 11 : i64} {
  func.func @dis_kernel(%arg0: i32, %arg1: memref<2xf32, #tpu.memory_space<smem>>, %arg2: memref<8x128xf32, #tpu.memory_space<vmem>>, %arg3: memref<8x128xf32, #tpu.memory_space<vmem>>) attributes {dimension_semantics = [#tpu.dimension_semantics<parallel>], iteration_bounds = array<i64: 1>, scalar_prefetch = 0 : i64, scratch_operands = 0 : i64, tpu.core_type = #tpu.core_type<tc>, window_params = [{transform_indices = @transform_0, window_bounds = array<i64: 2>}, {transform_indices = @transform_1, window_bounds = array<i64: 8, 128>}, {transform_indices = @transform_2, window_bounds = array<i64: 8, 128>}]} {
    %c0 = arith.constant 0 : index
    %0 = memref.load %arg1[%c0] : memref<2xf32, #tpu.memory_space<smem>>
    %c1 = arith.constant 1 : index
    %1 = memref.load %arg1[%c1] : memref<2xf32, #tpu.memory_space<smem>>
    %c0_0 = arith.constant 0 : index
    %c0_1 = arith.constant 0 : index
    %2 = vector.load %arg2[%c0_0, %c0_1] : memref<8x128xf32, #tpu.memory_space<vmem>>, vector<8x128xf32>
    %3 = vector.broadcast %0 : f32 to vector<8x128xf32>
    %4 = arith.mulf %2, %3 : vector<8x128xf32>
    %5 = vector.broadcast %1 : f32 to vector<8x128xf32>
    %6 = arith.addf %4, %5 : vector<8x128xf32>
    %7 = arith.negf %6 : vector<8x128xf32>
    %8 = math.exp %7 : vector<8x128xf32>
    %cst = arith.constant 1.000000e+00 : f32
    %9 = vector.broadcast %cst : f32 to vector<8x128xf32>
    %10 = arith.addf %9, %8 : vector<8x128xf32>
    %11 = arith.divf %9, %10 : vector<8x128xf32>
    %c0_2 = arith.constant 0 : index
    %c0_3 = arith.constant 0 : index
    %12 = vector.load %arg3[%c0_2, %c0_3] : memref<8x128xf32, #tpu.memory_space<vmem>>, vector<8x128xf32>
    tpu.vector_store %arg3[%c0_2, %c0_3], %11 {strides = array<i32>} : memref<8x128xf32, #tpu.memory_space<vmem>>, vector<8x128xf32>,
    return
  }
  func.func @transform_0(%arg0: i32) -> i32 {
    %c0_i32 = arith.constant 0 : i32
    %c0_i32_0 = arith.constant 0 : i32
    return %c0_i32 : i32
  }
  func.func @transform_1(%arg0: i32) -> (i32, i32) {
    %c0_i32 = arith.constant 0 : i32
    %c0_i32_0 = arith.constant 0 : i32
    return %arg0, %c0_i32 : i32, i32
  }
  func.func @transform_2(%arg0: i32) -> (i32, i32) {
    %c0_i32 = arith.constant 0 : i32
    %c0_i32_0 = arith.constant 0 : i32
    return %arg0, %c0_i32 : i32, i32
  }
}

</mosaic_0001>

<llo_original>
// kernel: tpu_custom_call.1
$region0: #{tpu_custom_call.1}
  #allocation0 [shape = 'u32[]', space=smem, size = 0x4, offset = 0x4, fixed_abs, tag = 'smem constant byte address 0x4 - core index']
  #allocation1 [shape = 'u32[144,128]{1,0:T(1,128)}', space=vmem, size = 0x12000, scoped, tag = 'internal scratch']
  %s0 = inlined_call_operand.hbm [shape: f32[2], index: 0, kind: input, shape index: {}]
  %s1 = inlined_call_operand.hbm [shape: f32[8,128], index: 1, kind: input, shape index: {}]
  %s2 = inlined_call_operand.hbm [shape: f32[8,128], index: 2, kind: output, shape index: {}]
  %s3 = sld [smem:[#allocation0]]
  $region26: #{tpu_custom_call.1} parent=0
    _
  %s5 = ssub.s32 1, %s3
  %s6 = scalar_select 0, %s5, %s3
  $region1: #{tpu_custom_call.1} parent=0
    #allocation2 [shape = 'u8[512]{0}', space=smem, size = 0x200, scoped, tag = 'input window, operand 0, single buffered']
    #allocation3 [shape = 's32[1]{0}', space=sflag, size = 0x4, scoped, tag = 'scoped memory for tpu_custom_call.1']
    #allocation4 [shape = 's32[1]{0}', space=sflag, size = 0x4, scoped, tag = 'scoped memory for tpu_custom_call.1']
    #allocation5 [shape = 's32[1]{0}', space=sflag, size = 0x4, scoped, tag = 'scoped memory for tpu_custom_call.1']
    #allocation6 [shape = 'u8[4096]{0}', space=vmem, size = 0x1000, scoped, tag = 'input window, operand 1, single buffered']
    #allocation7 [shape = 'u8[4096]{0}', space=vmem, size = 0x1000, scoped, tag = 'output window, operand 0, single buffered']
    %7 = vsyncpa [#allocation5], 0
    %8 = vsyncpa [#allocation3], 0
    %9 = vsyncpa [#allocation4], 0
    // Predicated region
    $region2: #{tpu_custom_call.1} parent=1 // pred_check
      _
    $region3: #{tpu_custom_call.1} parent=1 // pred_check_branch
      %11 = sbr.rel (0) target = $region5
    $region4: #{tpu_custom_call.1} parent=1 // pred_region
      %s13 = ssub.s32 16, 16
      %14 = vsyncadd [#allocation5], %s13
      %17 = dma.hbm_to_smem %s0, 16, [#allocation2], [#allocation5]
    $region5: #{tpu_custom_call.1} parent=1 // pred_fallthru
      _
    // Predicated region
    $region6: #{tpu_custom_call.1} parent=1 // pred_check
      _
    $region7: #{tpu_custom_call.1} parent=1 // pred_check_branch
      %19 = sbr.rel (0) target = $region9
    $region8: #{tpu_custom_call.1} parent=1 // pred_region
      %s21 = ssub.s32 128, 128
      %22 = vsyncadd [#allocation3], %s21
      %s24 = sshll.u32 [#allocation6], 4
      %s25 = int_to_ptr.vmem [resolvable:$true] %s24
      %27 = dma.hbm_to_vmem [thread:$0]  %s1, 128, %s25, [#allocation3]
    $region9: #{tpu_custom_call.1} parent=1 // pred_fallthru
      _
    // Predicated region
    $region10: #{tpu_custom_call.1} parent=1 // pred_check
      _
    $region11: #{tpu_custom_call.1} parent=1 // pred_check_branch
      %29 = sbr.rel (0) target = $region13
    $region12: #{tpu_custom_call.1} parent=1 // pred_region
      %30 = dma.done [#allocation5], 16
    $region13: #{tpu_custom_call.1} parent=1 // pred_fallthru
      _
    // Predicated region
    $region14: #{tpu_custom_call.1} parent=1 // pred_check
      _
    $region15: #{tpu_custom_call.1} parent=1 // pred_check_branch
      %32 = sbr.rel (0) target = $region17
    $region16: #{tpu_custom_call.1} parent=1 // pred_region
      %33 = dma.done [#allocation3], 128
    $region17: #{tpu_custom_call.1} parent=1 // pred_fallthru
      _
    %34 = sfence
    %s35 = sld [smem:[#allocation2]]
    %s36 = sld [smem:[#allocation2 + $0x1]]
    %v37 = vld [vmem:[#allocation6] sm:$0xff]
    %v38 = vstv %s35
    %v39 = vmul.f32 %v37, %v38
    %v40 = vstv %s36
    %v41 = vadd.f32 %v39, %v40
    %v42 = vxor.u32 %v41, 2147483648
    %v43 = vmul.f32 %v42, 1.442695
    %v44 = vpow.pop %v43
    %v45 = vadd.f32 %v44, 1.0
    %v46 = vrcp.pop %v45
    %v47 = vmul.f32 1.0, %v46
    %48 = vst [vmem:[#allocation7] sm:$0xff] %v47
    // Predicated region
    $region18: #{tpu_custom_call.1} parent=1 // pred_check
      _
    $region19: #{tpu_custom_call.1} parent=1 // pred_check_branch
      %50 = sbr.rel (0) target = $region21
    $region20: #{tpu_custom_call.1} parent=1 // pred_region
      %s52 = ssub.s32 128, 128
      %53 = vsyncadd [#allocation4], %s52
      %s55 = sshll.u32 [#allocation7], 4
      %s56 = int_to_ptr.vmem [resolvable:$true] %s55
      %58 = dma.vmem_to_hbm [thread:$0]  %s56, 128, %s2, [#allocation4]
    $region21: #{tpu_custom_call.1} parent=1 // pred_fallthru
      _
    // Predicated region
    $region22: #{tpu_custom_call.1} parent=1 // pred_check
      _
    $region23: #{tpu_custom_call.1} parent=1 // pred_check_branch
      %60 = sbr.rel (0) target = $region25
    $region24: #{tpu_custom_call.1} parent=1 // pred_region
      %61 = dma.done [#allocation4], 128
    $region25: #{tpu_custom_call.1} parent=1 // pred_fallthru
      _
    %62 = vsyncpa [#allocation3], 1
    %63 = vsyncpa [#allocation4], 1
    %64 = vsyncpa [#allocation5], 1

</llo_original>
